<compile_context>
chip_gen: v7x
topology: tpu7x:2x2x1
jax: 0.10.0
libtpu: 0.0.40
codegen_flags: <defaults>
</compile_context>

<pallas_src>
import jax
import jax.numpy as jnp
from jax.experimental import pallas as pl
from jax.experimental.pallas import tpu as pltpu


# --------------------------------------------------------------------------
# Stage 1: build the normalized DoRA weight W'
# --------------------------------------------------------------------------
def _wprime_kernel(v_ref, b_ref, a_ref, m_ref, w_ref):
    # delta_V = B @ A                      (D, R) @ (R, TK) -> (D, TK), f32 acc
    delta_v = jnp.dot(b_ref[...].astype(jnp.float32),
                      a_ref[...].astype(jnp.float32),
                      preferred_element_type=jnp.float32)
    v_prime = v_ref[...].astype(jnp.float32) + delta_v
    # column-wise sum of squares over D (torch.norm(dim=0))
    sumsq = jnp.sum(v_prime * v_prime, axis=0, keepdims=True)      # (1, TK)
    # NOTE: no epsilon, matching the reference module (zero column -> inf/NaN).
    inv_norm = jax.lax.rsqrt(sumsq)                                # EUP slot
    scale = m_ref[...].astype(jnp.float32) * inv_norm              # (1, TK)
    w_ref[...] = (v_prime * scale).astype(w_ref.dtype)


# --------------------------------------------------------------------------
# Stage 2: y = x @ W'^T + bias (tiled, f32 accumulator, NT contraction)
# --------------------------------------------------------------------------
def _matmul_bias_kernel(x_ref, w_ref, bias_ref, o_ref, acc_ref):
    @pl.when(pl.program_id(2) == 0)
    def _():
        acc_ref[...] = jnp.zeros_like(acc_ref)

    # (TM, TK) . (TD, TK) contracting over K  ->  (TM, TD); no explicit .T
    acc_ref[...] += jax.lax.dot_general(
        x_ref[...], w_ref[...],
        dimension_numbers=(((1,), (1,)), ((), ())),
        preferred_element_type=jnp.float32)

    @pl.when(pl.program_id(2) == pl.num_programs(2) - 1)
    def _():
        o_ref[...] = (acc_ref[...]
                      + bias_ref[...].astype(jnp.float32)).astype(o_ref.dtype)


def _pick_tile(dim, pref):
    """Largest tile <= pref that divides dim, preferring multiples of 128.
    Falls back to the full dim (keeps the (8,128)/full-dim BlockSpec rule)."""
    if dim <= pref:
        return dim
    if dim % pref == 0:
        return pref
    for t in range(pref - pref % 128, 127, -128):
        if dim % t == 0:
            return t
    # TODO(synk): odd large dims fall back to whole-axis blocks; pad instead
    # if this ever exceeds VMEM in practice.
    return dim


def dora_linear(x, V, dora_B, dora_A, dora_m, bias,
                *, tm=256, td=256, tk=512, tk_w=512):
    """DoRA linear forward. x: (..., K) -> (..., D)."""
    *lead, k = x.shape
    d, r = dora_B.shape
    x2 = x.reshape(-1, k)
    m_rows = x2.shape[0]
    if bias is None:
        bias = jnp.zeros((d,), x.dtype)

    vmem_cap = 48 * 1024 * 1024  # explicit scoped-VMEM headroom (v5e default is 16MiB)

    # ---------------- Stage 1: W' (D, K), once per call ----------------
    tkw = _pick_tile(k, tk_w)
    w_prime = pl.pallas_call(
        _wprime_kernel,
        out_shape=jax.ShapeDtypeStruct((d, k), x.dtype),
        grid_spec=pltpu.PrefetchScalarGridSpec(
            num_scalar_prefetch=0,
            grid=(k // tkw,),
            in_specs=[
                pl.BlockSpec((d, tkw), lambda j: (0, j)),   # V     (D, TK)
                pl.BlockSpec((d, r),   lambda j: (0, 0)),   # B     (D, R), resident
                pl.BlockSpec((r, tkw), lambda j: (0, j)),   # A     (R, TK)
                pl.BlockSpec((1, tkw), lambda j: (0, j)),   # m     (1, TK)
            ],
            out_specs=pl.BlockSpec((d, tkw), lambda j: (0, j)),
        ),
        compiler_params=pltpu.CompilerParams(
            dimension_semantics=("parallel",),
            vmem_limit_bytes=vmem_cap,
        ),
    )(V, dora_B, dora_A, dora_m.reshape(1, k))

    # ---------------- Stage 2: tiled y = x @ W'^T + bias ----------------
    tm_ = _pick_tile(m_rows, tm)
    td_ = _pick_tile(d, td)
    tk_ = _pick_tile(k, tk)

    itemsize = jnp.dtype(x.dtype).itemsize
    cost = pl.CostEstimate(
        flops=2 * m_rows * k * d + 2 * d * k * r,
        transcendentals=0,
        bytes_accessed=(m_rows * k + d * k + m_rows * d + d) * itemsize,
    )

    out = pl.pallas_call(
        _matmul_bias_kernel,
        out_shape=jax.ShapeDtypeStruct((m_rows, d), x.dtype),
        grid_spec=pltpu.PrefetchScalarGridSpec(
            num_scalar_prefetch=0,
            grid=(m_rows // tm_, d // td_, k // tk_),
            in_specs=[
                pl.BlockSpec((tm_, tk_), lambda i, j, kk: (i, kk)),  # x   (TM, TK)
                pl.BlockSpec((td_, tk_), lambda i, j, kk: (j, kk)),  # W'  (TD, TK)
                pl.BlockSpec((1, td_),   lambda i, j, kk: (0, j)),   # bias (1, TD)
            ],
            out_specs=pl.BlockSpec((tm_, td_), lambda i, j, kk: (i, j)),
            scratch_shapes=[pltpu.VMEM((tm_, td_), jnp.float32)],
        ),
        compiler_params=pltpu.CompilerParams(
            dimension_semantics=("parallel", "parallel", "arbitrary"),
            vmem_limit_bytes=vmem_cap,
        ),
        cost_estimate=cost,
    )(x2, w_prime, bias.reshape(1, d))

    return out.reshape(*lead, d)


# --------------------------------------------------------------------------
# Deterministic synthetic params + pure-JAX reference
# --------------------------------------------------------------------------
def init_dora_params(key, d, k, r, dtype=jnp.float32):
    k_w, k_b, k_a = jax.random.split(key, 3)
    bound_w = 1.0 / jnp.sqrt(k)
    W = jax.random.uniform(k_w, (d, k), dtype, minval=-bound_w, maxval=bound_w)
    bias = jax.random.uniform(k_b, (d,), dtype, minval=-bound_w, maxval=bound_w)
    V = W
    dora_m = jnp.linalg.norm(W, axis=0, keepdims=True).astype(dtype)
    dora_B = jnp.zeros((d, r), dtype)
    bound_a = jnp.sqrt(6.0 / k)  # kaiming-uniform-ish synthetic init
    dora_A = jax.random.uniform(k_a, (r, k), dtype, minval=-bound_a, maxval=bound_a)
    return V, dora_B, dora_A, dora_m, bias


def reference_forward(x, V, dora_B, dora_A, dora_m, bias):
    delta_v = dora_B @ dora_A
    v_prime = V + delta_v
    norm = jnp.linalg.norm(v_prime, axis=0, keepdims=True)
    w_prime = dora_m.reshape(1, -1) * (v_prime / norm)
    return x @ w_prime.T + bias


if __name__ == "__main__":
    key = jax.random.PRNGKey(0)
    k_params, k_x = jax.random.split(key)

    batch, seq = 2, 8
    d, k, r = 16, 32, 4  # out_features, in_features, rank

    V, dora_B, dora_A, dora_m, bias = init_dora_params(k_params, d, k, r)
    # Make B nonzero so the low-rank path actually contributes in the test.
    dora_B = 0.01 * jax.random.normal(jax.random.PRNGKey(1), (d, r), jnp.float32)

    x = jax.random.normal(k_x, (batch, seq, k), jnp.float32)

    out = dora_linear(x, V, dora_B, dora_A, dora_m, bias)
    out = jax.block_until_ready(out)

    ref = reference_forward(x.reshape(-1, k), V, dora_B, dora_A, dora_m, bias)
    ref = ref.reshape(batch, seq, d)

    assert out.shape == (batch, seq, d), out.shape
    assert jnp.allclose(out, ref, atol=1e-5, rtol=1e-5), \
        float(jnp.max(jnp.abs(out - ref)))

    print("KERNEL_OK")
</pallas_src>

<mosaic_0001>
module attributes {stable_mosaic.version = 11 : i64} {
  func.func @_wprime_kernel(%arg0: i32, %arg1: memref<16x32xf32, #tpu.memory_space<vmem>>, %arg2: memref<16x4xf32, #tpu.memory_space<vmem>>, %arg3: memref<4x32xf32, #tpu.memory_space<vmem>>, %arg4: memref<1x32xf32, #tpu.memory_space<vmem>>, %arg5: memref<16x32xf32, #tpu.memory_space<vmem>>) attributes {dimension_semantics = [#tpu.dimension_semantics<parallel>], iteration_bounds = array<i64: 1>, scalar_prefetch = 0 : i64, scratch_operands = 0 : i64, tpu.core_type = #tpu.core_type<tc>, window_params = [{transform_indices = @transform_0, window_bounds = array<i64: 16, 32>}, {pipeline_mode = #tpu.pipeline_mode<synchronous>, transform_indices = @transform_1, window_bounds = array<i64: 16, 4>}, {transform_indices = @transform_2, window_bounds = array<i64: 4, 32>}, {transform_indices = @transform_3, window_bounds = array<i64: 1, 32>}, {transform_indices = @transform_4, window_bounds = array<i64: 16, 32>}]} {
    %c0 = arith.constant 0 : index
    %c0_0 = arith.constant 0 : index
    %0 = vector.load %arg2[%c0, %c0_0] : memref<16x4xf32, #tpu.memory_space<vmem>>, vector<16x4xf32>
    %c0_1 = arith.constant 0 : index
    %c0_2 = arith.constant 0 : index
    %1 = vector.load %arg3[%c0_1, %c0_2] : memref<4x32xf32, #tpu.memory_space<vmem>>, vector<4x32xf32>
    %cst = arith.constant dense<0.000000e+00> : vector<16x32xf32>
    %2 = tpu.matmul %0, %1, %cst {dimension_numbers = #tpu.dot_dimension_numbers<[1], [0], [0], [1], [0, 0, 1, 1], [], []>} : vector<16x4xf32>, vector<4x32xf32>, vector<16x32xf32> -> vector<16x32xf32>
    %c0_3 = arith.constant 0 : index
    %c0_4 = arith.constant 0 : index
    %3 = vector.load %arg1[%c0_3, %c0_4] : memref<16x32xf32, #tpu.memory_space<vmem>>, vector<16x32xf32>
    %4 = arith.addf %3, %2 : vector<16x32xf32>
    %5 = arith.mulf %4, %4 : vector<16x32xf32>
    %cst_5 = arith.constant dense<0.000000e+00> : vector<32xf32>
    %6 = vector.multi_reduction <add>, %5, %cst_5 [0] : vector<16x32xf32> to vector<32xf32>
    %7 = vector.shape_cast %6 : vector<32xf32> to vector<1x32xf32>
    %8 = math.rsqrt %7 : vector<1x32xf32>
    %c0_6 = arith.constant 0 : index
    %c0_7 = arith.constant 0 : index
    %9 = vector.load %arg4[%c0_6, %c0_7] : memref<1x32xf32, #tpu.memory_space<vmem>>, vector<1x32xf32>
    %10 = arith.mulf %9, %8 : vector<1x32xf32>
    %11 = vector.broadcast %10 : vector<1x32xf32> to vector<16x32xf32>
    %12 = arith.mulf %4, %11 : vector<16x32xf32>
    %c0_8 = arith.constant 0 : index
    %c0_9 = arith.constant 0 : index
    %13 = vector.load %arg5[%c0_8, %c0_9] : memref<16x32xf32, #tpu.memory_space<vmem>>, vector<16x32xf32>
    tpu.vector_store %arg5[%c0_8, %c0_9], %12 {strides = array<i32>} : memref<16x32xf32, #tpu.memory_space<vmem>>, vector<16x32xf32>,
    return
  }
  func.func @transform_0(%arg0: i32) -> (i32, i32) {
    %c0_i32 = arith.constant 0 : i32
    %c0_i32_0 = arith.constant 0 : i32
    return %c0_i32, %arg0 : i32, i32
  }
  func.func @transform_1(%arg0: i32) -> (i32, i32) {
    %c0_i32 = arith.constant 0 : i32
    %c0_i32_0 = arith.constant 0 : i32
    %c0_i32_1 = arith.constant 0 : i32
    return %c0_i32, %c0_i32_0 : i32, i32
  }
  func.func @transform_2(%arg0: i32) -> (i32, i32) {
    %c0_i32 = arith.constant 0 : i32
    %c0_i32_0 = arith.constant 0 : i32
    return %c0_i32, %arg0 : i32, i32
  }
  func.func @transform_3(%arg0: i32) -> (i32, i32) {
    %c0_i32 = arith.constant 0 : i32
    %c0_i32_0 = arith.constant 0 : i32
    return %c0_i32, %arg0 : i32, i32
  }
  func.func @transform_4(%arg0: i32) -> (i32, i32) {
    %c0_i32 = arith.constant 0 : i32
    %c0_i32_0 = arith.constant 0 : i32
    return %c0_i32, %arg0 : i32, i32
  }
}

</mosaic_0001>

<llo_original>
// kernel: tpu_custom_call.1
$region0: #{tpu_custom_call.1}
  #allocation0 [shape = 'u32[]', space=smem, size = 0x4, offset = 0x4, fixed_abs, tag = 'smem constant byte address 0x4 - core index']
  #allocation1 [shape = 'u32[144,128]{1,0:T(1,128)}', space=vmem, size = 0x12000, scoped, tag = 'internal scratch']
  %s0 = inlined_call_operand.vmem [shape: f32[16,32], index: 0, kind: input, shape index: {}]
  %s1 = inlined_call_operand.vmem [shape: f32[16,4], index: 1, kind: input, shape index: {}]
  %s2 = inlined_call_operand.vmem [shape: f32[4,32], index: 2, kind: input, shape index: {}]
  %s3 = inlined_call_operand.vmem [shape: f32[1,32], index: 3, kind: input, shape index: {}]
  %s4 = inlined_call_operand.hbm [shape: f32[16,32], index: 4, kind: output, shape index: {}]
  %s5 = sld [smem:[#allocation0]]
  $region26: #{tpu_custom_call.1} parent=0
    _
  %s7 = ssub.s32 1, %s5
  %s8 = scalar_select 0, %s7, %s5
  $region1: #{tpu_custom_call.1} parent=0
    #allocation2 [shape = 'u8[8192]{0}', space=vmem, size = 0x2000, scoped, tag = 'output window, operand 0, single buffered']
    #allocation3 [shape = 's32[1]{0}', space=sflag, size = 0x4, scoped, tag = 'scoped memory for tpu_custom_call.1']
    %9 = vsyncpa [#allocation3], 0
    // Predicated region
    $region2: #{tpu_custom_call.1} parent=1 // pred_check
      _
    $region3: #{tpu_custom_call.1} parent=1 // pred_check_branch
      %11 = sbr.rel (0) target = $region5
    $region4: #{tpu_custom_call.1} parent=1 // pred_region
      _
    $region5: #{tpu_custom_call.1} parent=1 // pred_fallthru
      _
    // Predicated region
    $region6: #{tpu_custom_call.1} parent=1 // pred_check
      _
    $region7: #{tpu_custom_call.1} parent=1 // pred_check_branch
      %13 = sbr.rel (0) target = $region9
    $region8: #{tpu_custom_call.1} parent=1 // pred_region
      _
    $region9: #{tpu_custom_call.1} parent=1 // pred_fallthru
      _
    // Predicated region
    $region10: #{tpu_custom_call.1} parent=1 // pred_check
      _
    $region11: #{tpu_custom_call.1} parent=1 // pred_check_branch
      %15 = sbr.rel (0) target = $region13
    $region12: #{tpu_custom_call.1} parent=1 // pred_region
      _
    $region13: #{tpu_custom_call.1} parent=1 // pred_fallthru
      _
    // Predicated region
    $region14: #{tpu_custom_call.1} parent=1 // pred_check
      _
    $region15: #{tpu_custom_call.1} parent=1 // pred_check_branch
      %17 = sbr.rel (0) target = $region17
    $region16: #{tpu_custom_call.1} parent=1 // pred_region
      _
    $region17: #{tpu_custom_call.1} parent=1 // pred_fallthru
      _
    %v18 = vld [vmem:[%s1] sm:$0xff]
    %v19 = vld [vmem:[%s1 + $0x8] sm:$0xff]
    %v20 = vld [vmem:[%s2] sm:$0xf]
    %vm21 = vcmask 31744
    %v23 = vsel %vm21, %v18, 0
    %v26 = vsel %vm21, %v19, 0
    %vm28 = vcmask 1043456
    %v30 = vsel %vm28, %v20, 0
    %32 = vmatprep.subr.mxu0 0.0
    %33 = vmatpush1.msra.mxu0 %v30
    %34 = vmatprep.subr.mxu0 0.0
    %35 = vmatpush1.msra.mxu0 0.0
    %36 = vmatprep.subr.mxu0 0.0
    %37 = vmatpush1.msra.mxu0 0.0
    %38 = vmatprep.subr.mxu0 0.0
    %39 = vmatpush1.msra.mxu0 0.0
    %40 = vmatprep.subr.mxu0 0.0
    %41 = vmatpush1.msra.mxu0 0.0
    %42 = vmatprep.subr.mxu0 0.0
    %43 = vmatpush1.msra.mxu0 0.0
    %44 = vmatprep.subr.mxu0 0.0
    %45 = vmatpush1.msra.mxu0 0.0
    %46 = vmatprep.subr.mxu0 0.0
    %47 = vmatpush1.msra.mxu0 0.0
    %48 = vmatprep.subr.mxu0 0.0
    %49 = vmatpush1.msra.mxu0 0.0
    %50 = vmatprep.subr.mxu0 0.0
    %51 = vmatpush1.msra.mxu0 0.0
    %52 = vmatprep.subr.mxu0 0.0
    %53 = vmatpush1.msra.mxu0 0.0
    %54 = vmatprep.subr.mxu0 0.0
    %55 = vmatpush1.msra.mxu0 0.0
    %56 = vmatprep.subr.mxu0 0.0
    %57 = vmatpush1.msra.mxu0 0.0
    %58 = vmatprep.subr.mxu0 0.0
    %59 = vmatpush1.msra.mxu0 0.0
    %60 = vmatprep.subr.mxu0 0.0
    %61 = vmatpush1.msra.mxu0 0.0
    %62 = vmatprep.subr.mxu0 0.0
    %63 = vmatpush1.msra.mxu0 0.0
    %64 = vmatprep.subr.mxu0 0.0
    %65 = vmatpush1.msra.mxu0 0.0
    %66 = vmatprep.subr.mxu0 0.0
    %67 = vmatpush1.msra.mxu0 0.0
    %68 = vmatprep.subr.mxu0 0.0
    %69 = vmatpush1.msra.mxu0 0.0
    %70 = vmatprep.subr.mxu0 0.0
    %71 = vmatpush1.msra.mxu0 0.0
    %72 = vmatprep.subr.mxu0 0.0
    %73 = vmatpush1.msra.mxu0 0.0
    %74 = vmatprep.subr.mxu0 0.0
    %75 = vmatpush1.msra.mxu0 0.0
    %76 = vmatprep.subr.mxu0 0.0
    %77 = vmatpush1.msra.mxu0 0.0
    %78 = vmatprep.subr.mxu0 0.0
    %79 = vmatpush1.msra.mxu0 0.0
    %80 = vmatprep.subr.mxu0 0.0
    %81 = vmatpush1.msra.mxu0 0.0
    %82 = vmatprep.subr.mxu0 0.0
    %83 = vmatpush1.msra.mxu0 0.0
    %84 = vmatprep.subr.mxu0 0.0
    %85 = vmatpush1.msra.mxu0 0.0
    %86 = vmatprep.subr.mxu0 0.0
    %87 = vmatpush1.msra.mxu0 0.0
    %88 = vmatprep.subr.mxu0 0.0
    %89 = vmatpush1.msra.mxu0 0.0
    %90 = vmatprep.subr.mxu0 0.0
    %91 = vmatpush1.msra.mxu0 0.0
    %92 = vmatprep.subr.mxu0 0.0
    %93 = vmatpush1.msra.mxu0 0.0
    %94 = vmatprep.subr.mxu0 0.0
    %95 = vmatpush1.msra.mxu0 0.0
    %96 = vmatprep.mubr.f32.mxu0 0.0
    %97 = vmatmul.mubr.f32.gmra.mrb[0].mxu0 %v23
    %v98 = vpop.f32.mrb[0].mxu0
    %v99 = vadd.f32 0.0, %v98
    %v100 = vpop.f32.mrb[0].mxu0
    %101 = vmatprep.mubr.f32.mxu0 0.0
    %102 = vmatmul.mubr.f32.gmra.mrb[0].mxu0 %v26
    %v103 = vpop.f32.mrb[0].mxu0
    %v104 = vadd.f32 0.0, %v103
    %v105 = vpop.f32.mrb[0].mxu0
    %106 = vdwg.mxu0
    %v107 = vld [vmem:[%s0] sm:$0xff]
    %v108 = vld [vmem:[%s0 + $0x8] sm:$0xff]
    %v109 = vadd.f32 %v107, %v99
    %v110 = vadd.f32 %v108, %v104
    %v111 = vmul.f32 %v109, %v109
    %v112 = vmul.f32 %v110, %v110
    %vm113 = vcmask 261120
    %v114 = vsel %vm113, %v111, 0.0
    %v115 = vsel %vm113, %v112, 0.0
    %v116 = vadd.f32 %v114, %v115
    %v117 = vrot.slane %v116, 4
    %v118 = vadd.f32 %v116, %v117
    %v119 = vrot.slane %v118, 2
    %v120 = vadd.f32 %v118, %v119
    %v121 = vrot.slane %v120, 1
    %v122 = vadd.f32 %v120, %v121
    %v123 = vrsqrt.pop %v122
    %v124 = vld [vmem:[%s3] sm:$0x1]
    %v125 = vmul.f32 %v124, %v123
    %v127 = vlaneseq
    %v128 = vshrl.u32 %v127, 7
    %v129 = vsub.s32 0, %v128
    %v130 = vrot.slane %v125, %v129
    %v132 = vmul.f32 %v109, %v130
    %v133 = vmul.f32 %v110, %v130
    %134 = vst.msk [vmem:[#allocation2] sm:$0xff] %vm113, %v132
    %135 = vst.msk [vmem:[#allocation2 + $0x8] sm:$0xff] %vm113, %v133
    // Predicated region
    $region18: #{tpu_custom_call.1} parent=1 // pred_check
      _
    $region19: #{tpu_custom_call.1} parent=1 // pred_check_branch
      %137 = sbr.rel (0) target = $region21
    $region20: #{tpu_custom_call.1} parent=1 // pred_region
      %s139 = ssub.s32 256, 256
      %140 = vsyncadd [#allocation3], %s139
      %s141 = sshll.u32 [#allocation2], 4
      %s142 = int_to_ptr.vmem [resolvable:$true] %s141
      %147 = dma.vmem_to_hbm [thread:$0]  %s142, 256, %s4, [#allocation3], 128, 128, 8
    $region21: #{tpu_custom_call.1} parent=1 // pred_fallthru
      _
    // Predicated region
    $region22: #{tpu_custom_call.1} parent=1 // pred_check
      _
    $region23: #{tpu_custom_call.1} parent=1 // pred_check_branch
      %149 = sbr.rel (0) target = $region25
    $region24: #{tpu_custom_call.1} parent=1 // pred_region
      %150 = dma.done [#allocation3], 256
    $region25: #{tpu_custom_call.1} parent=1 // pred_fallthru
      _
    %151 = vsyncpa [#allocation3], 1

</llo_original>
